<compile_context>
chip_gen: v5e
topology: v5e:2x2
jax: 0.10.0
libtpu: 0.0.40
codegen_flags: <defaults>
</compile_context>

<pallas_src>
import functools

import jax
import jax.numpy as jnp
import numpy as np
from jax import lax
from jax.experimental import pallas as pl
from jax.experimental.pallas import tpu as pltpu


def _bilinear_mhs_kernel(num_labels, bias_ref, x_ref, wfc_ref, bfc_ref,
                         mflat_ref, out_ref, h_ref):
    # Grid: (B, T).  T = S // tS query-row tiles, innermost + "arbitrary" so
    # the fc result h (full sequence, batch b) is computed once at t == 0 and
    # reused from VMEM scratch for every row tile of that batch.
    t = pl.program_id(1)
    S, E = h_ref.shape
    tS = out_ref.shape[1]
    L = num_labels

    @pl.when(t == 0)
    def _():
        # h = x @ Wfc^T + b_fc for the whole sequence of batch b (f32 accum).
        h_ref[...] = (
            jnp.dot(x_ref[0], wfc_ref[...], preferred_element_type=jnp.float32)
            + bfc_ref[...]
        )

    h_all = h_ref[...].astype(jnp.bfloat16)                       # (S, E) keys
    start = pl.multiple_of(t * tS, tS)
    h_tile = h_ref[pl.ds(start, tS), :].astype(jnp.bfloat16)      # (tS, E) queries

    # One wide key matmul covering all labels: (tS, E) @ (E, L*E) -> (tS, L*E).
    k_all = jnp.dot(h_tile, mflat_ref[...],
                    preferred_element_type=jnp.float32)
    k_all = k_all.astype(jnp.bfloat16)                            # one cast

    # Per-label scores; L is small -> unrolled Python loop (no grid overhead).
    for l in range(L):
        k_l = k_all[:, l * E:(l + 1) * E]                         # (tS, E)
        # scores_l[i, j] = k_l[i, :] . h_all[j, :]  (contract last dims of
        # both operands -> no materialized transpose of h).
        scores = lax.dot_general(k_l, h_all, (((1,), (1,)), ((), ())),
                                 preferred_element_type=jnp.float32)  # (tS, S)
        out_ref[0, :, l * S:(l + 1) * S] = scores + bias_ref[l]


def _pick_row_tile(S, L):
    """Largest row tile (divisor of S, multiple of 8) whose f32 output block
    (tS, L*S) stays around 4 MiB so double-buffering is v7x-safe."""
    row_bytes = 4 * L * S
    cap = max(8, (4 << 20) // max(row_bytes, 1))
    if S <= cap or S % 8 != 0:
        return S
    t = (min(cap, S) // 8) * 8
    while t >= 8:
        if S % t == 0:
            return t
        t -= 8
    return S


def bilinear_mhs_layer2(x, w_fc, b_fc, w_bi, bias, num_labels):
    """x: (B, S, input_size) f32.  Returns (B, S, num_labels, S) f32."""
    B, S, In = x.shape
    E = w_fc.shape[0]
    L = int(num_labels)

    # Parameter glue (plain JAX, tiny tensors): pre-transpose / reshape and
    # cast matmul operands to bf16 (accumulation stays f32 in-kernel).
    x_bf = jnp.asarray(x, jnp.float32).astype(jnp.bfloat16)          # (B,S,In)
    wfc_t = jnp.asarray(w_fc, jnp.float32).T.astype(jnp.bfloat16)    # (In, E)
    bfc = jnp.asarray(b_fc, jnp.float32).reshape(1, E)               # (1, E) f32
    # M_flat[f, l*E + e] = W_bi[e*L + l, f]
    m_flat = jnp.transpose(
        jnp.asarray(w_bi, jnp.float32).reshape(E, L, E), (2, 1, 0)
    ).reshape(E, L * E).astype(jnp.bfloat16)                         # (E, L*E)
    bias = jnp.asarray(bias, jnp.float32)                            # (L,)

    tS = _pick_row_tile(S, L)
    T = S // tS

    grid_spec = pltpu.PrefetchScalarGridSpec(
        num_scalar_prefetch=0,
        grid=(B, T),
        in_specs=[
            # per-label bias, scalar-read from SMEM inside the kernel
            pl.BlockSpec(memory_space=pltpu.MemorySpace.SMEM),
            pl.BlockSpec((1, S, In), lambda b, t: (b, 0, 0)),        # x (bf16)
            pl.BlockSpec((In, E), lambda b, t: (0, 0)),              # Wfc^T
            pl.BlockSpec((1, E), lambda b, t: (0, 0)),               # b_fc
            pl.BlockSpec((E, L * E), lambda b, t: (0, 0)),           # M_flat
        ],
        # Output written directly in final layout: (B, S, L*S) -> reshape only.
        out_specs=pl.BlockSpec((1, tS, L * S), lambda b, t: (b, t, 0)),
        scratch_shapes=[pltpu.VMEM((S, E), jnp.float32)],            # h, batch b
    )

    flops = (2 * B * S * In * E            # fc
             + 2 * B * S * E * (L * E)     # key = h @ M_flat
             + 2 * B * L * S * S * E)      # scores
    bytes_accessed = (B * S * In * 2 + In * E * 2 + E * 4
                      + E * L * E * 2 + L * 4 + B * S * L * S * 4)
    cost = pl.CostEstimate(flops=flops, transcendentals=0,
                           bytes_accessed=bytes_accessed)

    # VMEM budget estimate (double-buffered in/out blocks + weights + scratch).
    vmem_need = (2 * S * In * 2 + 2 * tS * L * S * 4
                 + In * E * 2 + E * 4 + E * L * E * 2
                 + S * E * 4 + S * E * 2 + tS * L * E * 4 + tS * S * 4)
    cp_kwargs = dict(dimension_semantics=("parallel", "arbitrary"))
    if vmem_need > (16 << 20):
        cp_kwargs["vmem_limit_bytes"] = int(min(2 * vmem_need, 48 << 20))
    compiler_params = pltpu.CompilerParams(**cp_kwargs)

    out_flat = pl.pallas_call(
        functools.partial(_bilinear_mhs_kernel, L),
        out_shape=jax.ShapeDtypeStruct((B, S, L * S), jnp.float32),
        grid_spec=grid_spec,
        compiler_params=compiler_params,
        cost_estimate=cost,
    )(bias, x_bf, wfc_t, bfc, m_flat)

    # Free reshape to the PyTorch output layout (B, S, L, S) -- no transpose.
    return out_flat.reshape(B, S, L, S)


def _reference(x, w_fc, b_fc, w_bi, bias, num_labels):
    """Plain-JAX f32 replica of the PyTorch forward (for verification)."""
    B, S, _ = x.shape
    E = w_fc.shape[0]
    L = num_labels
    h = x @ w_fc.T + b_fc                                    # (B, S, E)
    key = h @ w_bi.T                                         # (B, S, E*L)
    key = key.reshape(B, S, E, L).transpose(0, 3, 1, 2)      # (B, L, S, E)
    value = h.transpose(0, 2, 1)[:, None]                    # (B, 1, E, S)
    out = jnp.matmul(key, value)                             # (B, L, S, S)
    out = out + bias[None, :, None, None]
    return out.transpose(0, 2, 1, 3)                         # (B, S, L, S)


if __name__ == "__main__":
    B, S = 2, 8
    input_size, hidden_size, num_labels = 16, 32, 4

    key = jax.random.PRNGKey(0)
    kx, kw1, kb1, kw2, kb3 = jax.random.split(key, 5)

    x = jax.random.normal(kx, (B, S, input_size), jnp.float32)
    # nn.Linear(input_size, hidden_size): weight (hidden, input), bias (hidden,)
    w_fc = jax.random.normal(kw1, (hidden_size, input_size), jnp.float32) * 0.1
    b_fc = jax.random.normal(kb1, (hidden_size,), jnp.float32) * 0.1
    # nn.Linear(hidden, hidden*num_labels, bias=False): weight (hidden*L, hidden)
    w_bi = jax.random.normal(kw2, (hidden_size * num_labels, hidden_size),
                             jnp.float32) * 0.1
    # module inits this to zeros; use nonzero here to exercise the bias path
    bias = jax.random.normal(kb3, (num_labels,), jnp.float32) * 0.1

    out = bilinear_mhs_layer2(x, w_fc, b_fc, w_bi, bias, num_labels)
    out = jax.block_until_ready(out)

    ref = _reference(x, w_fc, b_fc, w_bi, bias, num_labels)
    assert out.shape == (B, S, num_labels, S), out.shape
    # bf16 matmul operands with f32 accumulation -> loosened tolerance.
    np.testing.assert_allclose(np.asarray(out), np.asarray(ref),
                               rtol=5e-2, atol=5e-2)
    print("KERNEL_OK")
</pallas_src>

<mosaic_0001>
module attributes {stable_mosaic.version = 11 : i64} {
  func.func @_bilinear_mhs_kernel(%arg0: i32, %arg1: i32, %arg2: memref<4xf32, #tpu.memory_space<smem>>, %arg3: memref<1x8x16xbf16, #tpu.memory_space<vmem>>, %arg4: memref<16x32xbf16, #tpu.memory_space<vmem>>, %arg5: memref<1x32xf32, #tpu.memory_space<vmem>>, %arg6: memref<32x128xbf16, #tpu.memory_space<vmem>>, %arg7: memref<1x8x32xf32, #tpu.memory_space<vmem>>, %arg8: memref<8x32xf32, #tpu.memory_space<vmem>>) attributes {dimension_semantics = [#tpu.dimension_semantics<parallel>, #tpu.dimension_semantics<arbitrary>], iteration_bounds = array<i64: 2, 1>, scalar_prefetch = 0 : i64, scratch_operands = 1 : i64, tpu.core_type = #tpu.core_type<tc>, window_params = [{transform_indices = @transform_0, window_bounds = array<i64: 4>}, {transform_indices = @transform_1, window_bounds = array<i64: 1, 8, 16>}, {pipeline_mode = #tpu.pipeline_mode<synchronous>, transform_indices = @transform_2, window_bounds = array<i64: 16, 32>}, {pipeline_mode = #tpu.pipeline_mode<synchronous>, transform_indices = @transform_3, window_bounds = array<i64: 1, 32>}, {pipeline_mode = #tpu.pipeline_mode<synchronous>, transform_indices = @transform_4, window_bounds = array<i64: 32, 128>}, {transform_indices = @transform_5, window_bounds = array<i64: 1, 8, 32>}]} {
    %c0_i32 = arith.constant 0 : i32
    %0 = arith.cmpi eq, %arg1, %c0_i32 : i32
    %1 = arith.extui %0 : i1 to i32
    %c0_i32_0 = arith.constant 0 : i32
    %2 = arith.cmpi ne, %1, %c0_i32_0 : i32
    scf.if %2 {
      %c0_19 = arith.constant 0 : index
      %c0_20 = arith.constant 0 : index
      %c0_21 = arith.constant 0 : index
      %45 = vector.load %arg3[%c0_19, %c0_20, %c0_21] : memref<1x8x16xbf16, #tpu.memory_space<vmem>>, vector<1x8x16xbf16>
      %46 = vector.shape_cast %45 : vector<1x8x16xbf16> to vector<8x16xbf16>
      %c0_22 = arith.constant 0 : index
      %c0_23 = arith.constant 0 : index
      %47 = vector.load %arg4[%c0_22, %c0_23] : memref<16x32xbf16, #tpu.memory_space<vmem>>, vector<16x32xbf16>
      %cst_24 = arith.constant dense<0.000000e+00> : vector<8x32xf32>
      %48 = tpu.matmul %46, %47, %cst_24 {dimension_numbers = #tpu.dot_dimension_numbers<[1], [0], [0], [1], [0, 0, 1, 1], [], []>} : vector<8x16xbf16>, vector<16x32xbf16>, vector<8x32xf32> -> vector<8x32xf32>
      %c0_25 = arith.constant 0 : index
      %c0_26 = arith.constant 0 : index
      %49 = vector.load %arg5[%c0_25, %c0_26] : memref<1x32xf32, #tpu.memory_space<vmem>>, vector<1x32xf32>
      %50 = vector.broadcast %49 : vector<1x32xf32> to vector<8x32xf32>
      %51 = arith.addf %48, %50 : vector<8x32xf32>
      %c0_27 = arith.constant 0 : index
      %c0_28 = arith.constant 0 : index
      %52 = vector.load %arg8[%c0_27, %c0_28] : memref<8x32xf32, #tpu.memory_space<vmem>>, vector<8x32xf32>
      tpu.vector_store %arg8[%c0_27, %c0_28], %51 {strides = array<i32>} : memref<8x32xf32, #tpu.memory_space<vmem>>, vector<8x32xf32>,
    } else {
    }
    %c0 = arith.constant 0 : index
    %c0_1 = arith.constant 0 : index
    %3 = vector.load %arg8[%c0, %c0_1] : memref<8x32xf32, #tpu.memory_space<vmem>>, vector<8x32xf32>
    %4 = arith.truncf %3 : vector<8x32xf32> to vector<8x32xbf16>
    %c8_i32 = arith.constant 8 : i32
    %5 = arith.muli %arg1, %c8_i32 : i32
    %6 = tpu.assume_multiple %5, 8 : i32
    %7 = arith.index_cast %6 : i32 to index
    %c0_2 = arith.constant 0 : index
    %8 = vector.load %arg8[%7, %c0_2] : memref<8x32xf32, #tpu.memory_space<vmem>>, vector<8x32xf32>
    %9 = arith.truncf %8 : vector<8x32xf32> to vector<8x32xbf16>
    %c0_3 = arith.constant 0 : index
    %c0_4 = arith.constant 0 : index
    %10 = vector.load %arg6[%c0_3, %c0_4] : memref<32x128xbf16, #tpu.memory_space<vmem>>, vector<32x128xbf16>
    %cst = arith.constant dense<0.000000e+00> : vector<8x128xf32>
    %11 = tpu.matmul %9, %10, %cst {dimension_numbers = #tpu.dot_dimension_numbers<[1], [0], [0], [1], [0, 0, 1, 1], [], []>} : vector<8x32xbf16>, vector<32x128xbf16>, vector<8x128xf32> -> vector<8x128xf32>
    %12 = arith.truncf %11 : vector<8x128xf32> to vector<8x128xbf16>
    %13 = vector.extract_strided_slice %12 {offsets = [0, 0], sizes = [8, 32], strides = [1, 1]} : vector<8x128xbf16> to vector<8x32xbf16>
    %cst_5 = arith.constant dense<0.000000e+00> : vector<8x8xf32>
    %14 = tpu.matmul %13, %4, %cst_5 {dimension_numbers = #tpu.dot_dimension_numbers<[1], [1], [0], [0], [0, 0, 1, 0], [], []>} : vector<8x32xbf16>, vector<8x32xbf16>, vector<8x8xf32> -> vector<8x8xf32>
    %c0_6 = arith.constant 0 : index
    %15 = memref.load %arg2[%c0_6] : memref<4xf32, #tpu.memory_space<smem>>
    %16 = vector.broadcast %15 : f32 to vector<8x8xf32>
    %17 = arith.addf %14, %16 : vector<8x8xf32>
    %c0_7 = arith.constant 0 : index
    %c0_8 = arith.constant 0 : index
    %c0_9 = arith.constant 0 : index
    %18 = vector.load %arg7[%c0_7, %c0_8, %c0_9] : memref<1x8x32xf32, #tpu.memory_space<vmem>>, vector<1x8x8xf32>
    %19 = vector.shape_cast %18 : vector<1x8x8xf32> to vector<8x8xf32>
    %20 = vector.shape_cast %17 : vector<8x8xf32> to vector<1x8x8xf32>
    tpu.vector_store %arg7[%c0_7, %c0_8, %c0_9], %20 {strides = array<i32>} : memref<1x8x32xf32, #tpu.memory_space<vmem>>, vector<1x8x8xf32>,
    %21 = vector.extract_strided_slice %12 {offsets = [0, 32], sizes = [8, 32], strides = [1, 1]} : vector<8x128xbf16> to vector<8x32xbf16>
    %cst_10 = arith.constant dense<0.000000e+00> : vector<8x8xf32>
    %22 = tpu.matmul %21, %4, %cst_10 {dimension_numbers = #tpu.dot_dimension_numbers<[1], [1], [0], [0], [0, 0, 1, 0], [], []>} : vector<8x32xbf16>, vector<8x32xbf16>, vector<8x8xf32> -> vector<8x8xf32>
    %c1 = arith.constant 1 : index
    %23 = memref.load %arg2[%c1] : memref<4xf32, #tpu.memory_space<smem>>
    %24 = vector.broadcast %23 : f32 to vector<8x8xf32>
    %25 = arith.addf %22, %24 : vector<8x8xf32>
    %c0_11 = arith.constant 0 : index
    %c0_12 = arith.constant 0 : index
    %c8 = arith.constant 8 : index
    %26 = vector.load %arg7[%c0_11, %c0_12, %c8] : memref<1x8x32xf32, #tpu.memory_space<vmem>>, vector<1x8x8xf32>
    %27 = vector.shape_cast %26 : vector<1x8x8xf32> to vector<8x8xf32>
    %28 = vector.shape_cast %25 : vector<8x8xf32> to vector<1x8x8xf32>
    tpu.vector_store %arg7[%c0_11, %c0_12, %c8], %28 {strides = array<i32>} : memref<1x8x32xf32, #tpu.memory_space<vmem>>, vector<1x8x8xf32>,
    %29 = vector.extract_strided_slice %12 {offsets = [0, 64], sizes = [8, 32], strides = [1, 1]} : vector<8x128xbf16> to vector<8x32xbf16>
    %cst_13 = arith.constant dense<0.000000e+00> : vector<8x8xf32>
    %30 = tpu.matmul %29, %4, %cst_13 {dimension_numbers = #tpu.dot_dimension_numbers<[1], [1], [0], [0], [0, 0, 1, 0], [], []>} : vector<8x32xbf16>, vector<8x32xbf16>, vector<8x8xf32> -> vector<8x8xf32>
    %c2 = arith.constant 2 : index
    %31 = memref.load %arg2[%c2] : memref<4xf32, #tpu.memory_space<smem>>
    %32 = vector.broadcast %31 : f32 to vector<8x8xf32>
    %33 = arith.addf %30, %32 : vector<8x8xf32>
    %c0_14 = arith.constant 0 : index
    %c0_15 = arith.constant 0 : index
    %c16 = arith.constant 16 : index
    %34 = vector.load %arg7[%c0_14, %c0_15, %c16] : memref<1x8x32xf32, #tpu.memory_space<vmem>>, vector<1x8x8xf32>
    %35 = vector.shape_cast %34 : vector<1x8x8xf32> to vector<8x8xf32>
    %36 = vector.shape_cast %33 : vector<8x8xf32> to vector<1x8x8xf32>
    tpu.vector_store %arg7[%c0_14, %c0_15, %c16], %36 {strides = array<i32>} : memref<1x8x32xf32, #tpu.memory_space<vmem>>, vector<1x8x8xf32>,
    %37 = vector.extract_strided_slice %12 {offsets = [0, 96], sizes = [8, 32], strides = [1, 1]} : vector<8x128xbf16> to vector<8x32xbf16>
    %cst_16 = arith.constant dense<0.000000e+00> : vector<8x8xf32>
    %38 = tpu.matmul %37, %4, %cst_16 {dimension_numbers = #tpu.dot_dimension_numbers<[1], [1], [0], [0], [0, 0, 1, 0], [], []>} : vector<8x32xbf16>, vector<8x32xbf16>, vector<8x8xf32> -> vector<8x8xf32>
    %c3 = arith.constant 3 : index
    %39 = memref.load %arg2[%c3] : memref<4xf32, #tpu.memory_space<smem>>
    %40 = vector.broadcast %39 : f32 to vector<8x8xf32>
    %41 = arith.addf %38, %40 : vector<8x8xf32>
    %c0_17 = arith.constant 0 : index
    %c0_18 = arith.constant 0 : index
    %c24 = arith.constant 24 : index
    %42 = vector.load %arg7[%c0_17, %c0_18, %c24] : memref<1x8x32xf32, #tpu.memory_space<vmem>>, vector<1x8x8xf32>
    %43 = vector.shape_cast %42 : vector<1x8x8xf32> to vector<8x8xf32>
    %44 = vector.shape_cast %41 : vector<8x8xf32> to vector<1x8x8xf32>
    tpu.vector_store %arg7[%c0_17, %c0_18, %c24], %44 {strides = array<i32>} : memref<1x8x32xf32, #tpu.memory_space<vmem>>, vector<1x8x8xf32>,
    return
  }
  func.func @transform_0(%arg0: i32, %arg1: i32) -> i32 {
    %c0_i32 = arith.constant 0 : i32
    %c0_i32_0 = arith.constant 0 : i32
    return %c0_i32 : i32
  }
  func.func @transform_1(%arg0: i32, %arg1: i32) -> (i32, i32, i32) {
    %c0_i32 = arith.constant 0 : i32
    %c0_i32_0 = arith.constant 0 : i32
    %c0_i32_1 = arith.constant 0 : i32
    return %arg0, %c0_i32, %c0_i32_0 : i32, i32, i32
  }
  func.func @transform_2(%arg0: i32, %arg1: i32) -> (i32, i32) {
    %c0_i32 = arith.constant 0 : i32
    %c0_i32_0 = arith.constant 0 : i32
    %c0_i32_1 = arith.constant 0 : i32
    return %c0_i32, %c0_i32_0 : i32, i32
  }
  func.func @transform_3(%arg0: i32, %arg1: i32) -> (i32, i32) {
    %c0_i32 = arith.constant 0 : i32
    %c0_i32_0 = arith.constant 0 : i32
    %c0_i32_1 = arith.constant 0 : i32
    return %c0_i32, %c0_i32_0 : i32, i32
  }
  func.func @transform_4(%arg0: i32, %arg1: i32) -> (i32, i32) {
    %c0_i32 = arith.constant 0 : i32
    %c0_i32_0 = arith.constant 0 : i32
    %c0_i32_1 = arith.constant 0 : i32
    return %c0_i32, %c0_i32_0 : i32, i32
  }
  func.func @transform_5(%arg0: i32, %arg1: i32) -> (i32, i32, i32) {
    %c0_i32 = arith.constant 0 : i32
    %c0_i32_0 = arith.constant 0 : i32
    return %arg0, %arg1, %c0_i32 : i32, i32, i32
  }
}

</mosaic_0001>

<llo_original>
// kernel: tpu_custom_call.1
$region0: #{tpu_custom_call.1}
  #allocation0 [shape = 'u32[]', space=smem, size = 0x4, offset = 0x4, fixed_abs, tag = 'smem constant byte address 0x4 - core index']
  #allocation1 [shape = 'u32[72,128]{1,0:T(1,128)}', space=vmem, size = 0x9000, scoped, tag = 'internal scratch']
  #allocation2 [shape = 'f32[8,32]{1,0:T(8,128)}', space=vmem, size = 0x1000, scoped, tag = 'scratch operand']
  %s0 = inlined_call_operand.hbm [shape: f32[4], index: 0, kind: input, shape index: {}]
  %s1 = inlined_call_operand.hbm [shape: bf16[2,8,16], index: 1, kind: input, shape index: {}]
  %s2 = inlined_call_operand.hbm [shape: bf16[16,32], index: 2, kind: input, shape index: {}]
  %s3 = inlined_call_operand.vmem [shape: f32[1,32], index: 3, kind: input, shape index: {}]
  %s4 = inlined_call_operand.hbm [shape: bf16[32,128], index: 4, kind: input, shape index: {}]
  %s5 = inlined_call_operand.hbm [shape: f32[2,8,32], index: 5, kind: output, shape index: {}]
  %s6 = sld [smem:[#allocation0]]
  $region73: #{tpu_custom_call.1} parent=0
    _
  %s8 = ssub.s32 1, %s6
  %s9 = scalar_select 0, %s8, %s6
  $region1: #{tpu_custom_call.1} parent=0
    #allocation3 [shape = 'u8[512]{0}', space=smem, size = 0x200, scoped, tag = 'input window, operand 0, single buffered']
    #allocation4 [shape = 's32[2]{0}', space=sflag, size = 0x8, scoped, tag = 'scoped memory for tpu_custom_call.1']
    #allocation5 [shape = 's32[2]{0}', space=sflag, size = 0x8, scoped, tag = 'scoped memory for tpu_custom_call.1']
    #allocation6 [shape = 's32[2]{0}', space=sflag, size = 0x8, scoped, tag = 'scoped memory for tpu_custom_call.1']
    #allocation7 [shape = 'u8[4096]{0}', space=vmem, size = 0x1000, scoped, tag = 'input window, operand 1']
    #allocation8 [shape = 'u8[4096]{0}', space=vmem, size = 0x1000, scoped, tag = 'input window, operand 2, single buffered']
    #allocation9 [shape = 's32[1]{0}', space=sflag, size = 0x4, scoped, tag = 'scoped memory for tpu_custom_call.1']
    #allocation10 [shape = 'u8[8192]{0}', space=vmem, size = 0x2000, scoped, tag = 'input window, operand 4, single buffered']
    #allocation11 [shape = 'u8[8192]{0}', space=vmem, size = 0x2000, scoped, tag = 'output window, operand 0']
    %10 = vsyncpa [#allocation6], 0
    %11 = vsyncpa [#allocation4], 0
    %s12 = scalar_lea.sflag [#allocation4], 1
    %13 = vsyncpa %s12, 0
    %14 = vsyncpa [#allocation9], 0
    %15 = vsyncpa [#allocation5], 0
    %s16 = scalar_lea.sflag [#allocation5], 1
    %17 = vsyncpa %s16, 0
    loop: start=0, step=1, limit=4
    $region2: #{tpu_custom_call.1} parent=1 // loop_pre_header
      _
    $region3: #{tpu_custom_call.1} parent=1 // loop_header
      %s19 = sphi 0, %s23
      %p20 = scmp.ge.s32.totalorder %s19, 4
      %s26 = sphi 0, %s38
      %s27 = sphi 0, %s34
      %s28 = sphi 0, %s26
      %s29 = sphi 0, %s27
      %s30 = sphi 0, %s28
      %s31 = sphi 0, %s29
      %s39 = sphi 0, %s39
      %s41 = sphi 0, %s39
      %s42 = sphi 0, %s41
      %s56 = sphi 0, %s42
      %s62 = sphi 0, %s64
      %s65 = sphi 0, %s62
      %s66 = sphi 0, %s65
      %s82 = sphi 0, %s66
      %s86 = sphi 0, %s86
      %s88 = sphi 0, %s86
      %s89 = sphi 0, %s88
      %s103 = sphi 0, %s89
      %s107 = sphi 0, %s107
      %s109 = sphi 0, %s107
      %s110 = sphi 0, %s109
      %s124 = sphi 0, %s110
      %s128 = sphi 0, %s128
      %s130 = sphi 0, %s128
      %s131 = sphi 0, %s130
      %s145 = sphi 0, %s131
      %s153 = sphi 0, %s155
      %s156 = sphi 0, %s153
      %s157 = sphi 0, %s156
      %s173 = sphi 0, %s157
    $region4: #{tpu_custom_call.1} parent=1 // loop_header_branch
      %22 = sbr.rel (%p20) target = $region8
    $region5: #{tpu_custom_call.1} parent=1 // loop_body
      %s24 = ssub.s32 %s19, 1
      %s25 = ssub.s32 %s19, 2
      %s32 = sadd.s32 1, %s27
      %p33 = scmp.ge.s32.totalorder %s32, 1
      %s34 = scalar_select %p33, 0, %s32
      %s35 = sadd.s32 1, %s26
      %s36 = scalar_select %p33, %s35, %s26
      %p37 = scmp.ge.s32.totalorder %s36, 2
      %s38 = scalar_select %p37, 0, %s36
      %s40 = sadd.s32 %s39, 1
      %p43 = scmp.eq.s32.totalorder %s19, 1
      %p44 = scmp.ne.s32.totalorder %s39, %s41
      %p45 = scmp.eq.s32.totalorder %s19, 0
      %p46 = por %p44, %p45
      %p47 = scmp.ne.s32.totalorder %s39, %s41
      %p48 = scmp.eq.s32.totalorder %s24, 1
      %p49 = por %p47, %p48
      %p50 = scmp.ne.s32.totalorder %s41, %s42
      %p51 = scmp.eq.s32.totalorder %s24, 0
      %p52 = por %p50, %p51
      %p53 = scmp.ne.s32.totalorder %s41, %s42
      %p54 = scmp.eq.s32.totalorder %s25, 1
      %p55 = por %p53, %p54
      %p57 = scmp.ne.s32.totalorder %s42, %s56
      %p58 = scmp.eq.s32.totalorder %s25, 0
      %p59 = por %p57, %p58
      %s60 = ssub.s32 %s26, %s38
      %p61 = scmp.eq.s32.totalorder %s60, 0
      %s63 = sadd.s32 %s62, 1
      %s64 = scalar_select %p61, %s62, %s63
      %p67 = pneg %p61
      %p68 = scmp.eq.s32.totalorder %s19, 1
      %p69 = por %p67, %p68
      %p70 = scmp.ne.s32.totalorder %s62, %s65
      %p71 = scmp.eq.s32.totalorder %s19, 0
      %p72 = por %p70, %p71
      %p73 = scmp.ne.s32.totalorder %s62, %s65
      %p74 = scmp.eq.s32.totalorder %s24, 1
      %p75 = por %p73, %p74
      %p76 = scmp.ne.s32.totalorder %s65, %s66
      %p77 = scmp.eq.s32.totalorder %s24, 0
      %p78 = por %p76, %p77
      %p79 = scmp.ne.s32.totalorder %s65, %s66
      %p80 = scmp.eq.s32.totalorder %s25, 1
      %p81 = por %p79, %p80
      %p83 = scmp.ne.s32.totalorder %s66, %s82
      %p84 = scmp.eq.s32.totalorder %s25, 0
      %p85 = por %p83, %p84
      %s87 = sadd.s32 %s86, 1
      %p90 = scmp.eq.s32.totalorder %s19, 1
      %p91 = scmp.ne.s32.totalorder %s86, %s88
      %p92 = scmp.eq.s32.totalorder %s19, 0
      %p93 = por %p91, %p92
      %p94 = scmp.ne.s32.totalorder %s86, %s88
      %p95 = scmp.eq.s32.totalorder %s24, 1
      %p96 = por %p94, %p95
      %p97 = scmp.ne.s32.totalorder %s88, %s89
      %p98 = scmp.eq.s32.totalorder %s24, 0
      %p99 = por %p97, %p98
      %p100 = scmp.ne.s32.totalorder %s88, %s89
      %p101 = scmp.eq.s32.totalorder %s25, 1
      %p102 = por %p100, %p101
      %p104 = scmp.ne.s32.totalorder %s89, %s103
      %p105 = scmp.eq.s32.totalorder %s25, 0
      %p106 = por %p104, %p105
      %s108 = sadd.s32 %s107, 1
      %p111 = scmp.eq.s32.totalorder %s19, 1
      %p112 = scmp.ne.s32.totalorder %s107, %s109
      %p113 = scmp.eq.s32.totalorder %s19, 0
      %p114 = por %p112, %p113
      %p115 = scmp.ne.s32.totalorder %s107, %s109
      %p116 = scmp.eq.s32.totalorder %s24, 1
      %p117 = por %p115, %p116
      %p118 = scmp.ne.s32.totalorder %s109, %s110
      %p119 = scmp.eq.s32.totalorder %s24, 0
      %p120 = por %p118, %p119
      %p121 = scmp.ne.s32.totalorder %s109, %s110
      %p122 = scmp.eq.s32.totalorder %s25, 1
      %p123 = por %p121, %p122
      %p125 = scmp.ne.s32.totalorder %s110, %s124
      %p126 = scmp.eq.s32.totalorder %s25, 0
      %p127 = por %p125, %p126
      %s129 = sadd.s32 %s128, 1
      %p132 = scmp.eq.s32.totalorder %s19, 1
      %p133 = scmp.ne.s32.totalorder %s128, %s130
      %p134 = scmp.eq.s32.totalorder %s19, 0
      %p135 = por %p133, %p134
      %p136 = scmp.ne.s32.totalorder %s128, %s130
      %p137 = scmp.eq.s32.totalorder %s24, 1
      %p138 = por %p136, %p137
      %p139 = scmp.ne.s32.totalorder %s130, %s131
      %p140 = scmp.eq.s32.totalorder %s24, 0
      %p141 = por %p139, %p140
      %p142 = scmp.ne.s32.totalorder %s130, %s131
      %p143 = scmp.eq.s32.totalorder %s25, 1
      %p144 = por %p142, %p143
      %p146 = scmp.ne.s32.totalorder %s131, %s145
      %p147 = scmp.eq.s32.totalorder %s25, 0
      %p148 = por %p146, %p147
      %s149 = ssub.s32 %s26, %s38
      %s150 = ssub.s32 %s27, %s34
      %s151 = sor.u32 %s149, %s150
      %p152 = scmp.eq.s32.totalorder %s151, 0
      %s154 = sadd.s32 %s153, 1
      %s155 = scalar_select %p152, %s153, %s154
      %p158 = pneg %p152
      %p159 = scmp.eq.s32.totalorder %s19, 1
      %p160 = por %p158, %p159
      %p161 = scmp.ne.s32.totalorder %s153, %s156
      %p162 = scmp.eq.s32.totalorder %s19, 0
      %p163 = por %p161, %p162
      %p164 = scmp.ne.s32.totalorder %s153, %s156
      %p165 = scmp.eq.s32.totalorder %s24, 1
      %p166 = por %p164, %p165
      %p167 = scmp.ne.s32.totalorder %s156, %s157
      %p168 = scmp.eq.s32.totalorder %s24, 0
      %p169 = por %p167, %p168
      %p170 = scmp.ne.s32.totalorder %s156, %s157
      %p171 = scmp.eq.s32.totalorder %s25, 1
      %p172 = por %p170, %p171
      %p174 = scmp.ne.s32.totalorder %s157, %s173
      %p175 = scmp.eq.s32.totalorder %s25, 0
      %p176 = por %p174, %p175
      %p177 = scmp.le.s32.totalorder 1, %s19
      %p178 = scmp.lt.s32.totalorder %s19, 3
      %p179 = pnand %p177, %p178
      %p180 = pneg %p179
      // Predicated region
      $region9: #{tpu_custom_call.1} parent=5 // pred_check
        _
      $region10: #{tpu_custom_call.1} parent=5 // pred_check_branch
        %182 = sbr.rel (%p179) target = $region12
      $region11: #{tpu_custom_call.1} parent=5 // pred_region
        %s183 = ssub.s32 %s19, 1
        // Predicated region
        $region13: #{tpu_custom_call.1} parent=11 // pred_check
          %p184 = pneg %p52
        $region14: #{tpu_custom_call.1} parent=11 // pred_check_branch
          %186 = sbr.rel (%p184) target = $region16
        $region15: #{tpu_custom_call.1} parent=11 // pred_region
          %188 = vsyncadd [#allocation6], 0
          %s190 = sshll.u32 %s0, 4
          %s191 = int_to_ptr.hbm [resolvable:$true] %s190
          %193 = dma.hbm_to_smem %s191, 16, [#allocation3], [#allocation6]
        $region16: #{tpu_custom_call.1} parent=11 // pred_fallthru
          _
        // Predicated region
        $region17: #{tpu_custom_call.1} parent=11 // pred_check
          %p194 = pneg %p99
        $region18: #{tpu_custom_call.1} parent=11 // pred_check_branch
          %196 = sbr.rel (%p194) target = $region20
        $region19: #{tpu_custom_call.1} parent=11 // pred_region
          %198 = vsyncadd [#allocation9], 0
          %s199 = sshll.u32 %s2, 4
          %s200 = int_to_ptr.hbm [resolvable:$true] %s199
          %s201 = sshll.u32 [#allocation8], 4
          %s202 = int_to_ptr.vmem [resolvable:$true] %s201
          %207 = dma.hbm_to_vmem [thread:$0]  %s200, 128, %s202, [#allocation9], 64, 64, 4
        $region20: #{tpu_custom_call.1} parent=11 // pred_fallthru
          _
        // Predicated region
        $region21: #{tpu_custom_call.1} parent=11 // pred_check
          %p208 = pneg %p120
        $region22: #{tpu_custom_call.1} parent=11 // pred_check_branch
          %210 = sbr.rel (%p208) target = $region24
        $region23: #{tpu_custom_call.1} parent=11 // pred_region
          _
        $region24: #{tpu_custom_call.1} parent=11 // pred_fallthru
          _
        // Predicated region
        $region25: #{tpu_custom_call.1} parent=11 // pred_check
          %p211 = pneg %p141
        $region26: #{tpu_custom_call.1} parent=11 // pred_check_branch
          %213 = sbr.rel (%p211) target = $region28
        $region27: #{tpu_custom_call.1} parent=11 // pred_region
          %215 = vsyncadd [#allocation9], 0
          %s216 = sshll.u32 %s4, 4
          %s217 = int_to_ptr.hbm [resolvable:$true] %s216
          %s218 = sshll.u32 [#allocation10], 4
          %s219 = int_to_ptr.vmem [resolvable:$true] %s218
          %224 = dma.hbm_to_vmem [thread:$0]  %s217, 256, %s219, [#allocation9], 64, 64, 4
        $region28: #{tpu_custom_call.1} parent=11 // pred_fallthru
          _
      $region12: #{tpu_custom_call.1} parent=5 // pred_fallthru
        _
      %p225 = scmp.lt.s32.totalorder %s19, 2
      // Predicated region
      $region29: #{tpu_custom_call.1} parent=5 // pred_check
        %p226 = pneg %p225
      $region30: #{tpu_custom_call.1} parent=5 // pred_check_branch
        %228 = sbr.rel (%p226) target = $region32
      $region31: #{tpu_custom_call.1} parent=5 // pred_region
        // Predicated region
        $region33: #{tpu_custom_call.1} parent=31 // pred_check
          %p229 = pneg %p72
        $region34: #{tpu_custom_call.1} parent=31 // pred_check_branch
          %231 = sbr.rel (%p229) target = $region36
        $region35: #{tpu_custom_call.1} parent=31 // pred_region
          %s232 = sand.u32 %s62, 1
          %s233 = scalar_lea.sflag [#allocation4], %s232
          %s234 = sand.u32 %s62, 1
          %s235 = smul.addr %s234, 4
          %s236 = scalar_lea.vmem [#allocation7], %s235
          %238 = vsyncadd %s233, 0
          %s239 = smul.addr %s26, 4
          %s240 = scalar_lea.hbm %s1, %s239
          %s242 = sshll.u32 %s240, 4
          %s243 = int_to_ptr.hbm [resolvable:$true] %s242
          %s244 = sshll.u32 %s236, 4
          %s245 = int_to_ptr.vmem [resolvable:$true] %s244
          %247 = dma.hbm_to_vmem [thread:$0]  %s243, 64, %s245, %s233
        $region36: #{tpu_custom_call.1} parent=31 // pred_fallthru
          _
      $region32: #{tpu_custom_call.1} parent=5 // pred_fallthru
        _
      %p248 = scmp.le.s32.totalorder 1, %s19
      %p249 = scmp.lt.s32.totalorder %s19, 3
      %p250 = pnand %p248, %p249
      %p251 = pneg %p250
      // Predicated region
      $region37: #{tpu_custom_call.1} parent=5 // pred_check
        _
      $region38: #{tpu_custom_call.1} parent=5 // pred_check_branch
        %253 = sbr.rel (%p250) target = $region40
      $region39: #{tpu_custom_call.1} parent=5 // pred_region
        %s254 = ssub.s32 %s19, 1
        // Predicated region
        $region41: #{tpu_custom_call.1} parent=39 // pred_check
          %p255 = pneg %p52
        $region42: #{tpu_custom_call.1} parent=39 // pred_check_branch
          %257 = sbr.rel (%p255) target = $region44
        $region43: #{tpu_custom_call.1} parent=39 // pred_region
          %259 = dma.done [#allocation6], 16
        $region44: #{tpu_custom_call.1} parent=39 // pred_fallthru
          _
        %s260 = sand.u32 %s65, 1
        %s261 = scalar_lea.sflag [#allocation4], %s260
        %s262 = sand.u32 %s65, 1
        %s263 = smul.addr %s262, 4
        %s264 = scalar_lea.vmem [#allocation7], %s263
        // Predicated region
        $region45: #{tpu_custom_call.1} parent=39 // pred_check
          %p265 = pneg %p78
        $region46: #{tpu_custom_call.1} parent=39 // pred_check_branch
          %267 = sbr.rel (%p265) target = $region48
        $region47: #{tpu_custom_call.1} parent=39 // pred_region
          %269 = dma.done %s261, 64
        $region48: #{tpu_custom_call.1} parent=39 // pred_fallthru
          _
        // Predicated region
        $region49: #{tpu_custom_call.1} parent=39 // pred_check
          %p270 = pneg %p99
        $region50: #{tpu_custom_call.1} parent=39 // pred_check_branch
          %272 = sbr.rel (%p270) target = $region52
        $region51: #{tpu_custom_call.1} parent=39 // pred_region
          %274 = dma.done [#allocation9], 128
        $region52: #{tpu_custom_call.1} parent=39 // pred_fallthru
          _
        // Predicated region
        $region53: #{tpu_custom_call.1} parent=39 // pred_check
          %p275 = pneg %p141
        $region54: #{tpu_custom_call.1} parent=39 // pred_check_branch
          %277 = sbr.rel (%p275) target = $region56
        $region55: #{tpu_custom_call.1} parent=39 // pred_region
          %279 = dma.done [#allocation9], 256
        $region56: #{tpu_custom_call.1} parent=39 // pred_fallthru
          _
        %280 = sfence
        %p281 = pneg %p52
        %p282 = pneg %p49
        %s283 = sand.u32 %s65, 1
        %s284 = scalar_lea.sflag [#allocation4], %s283
        %s285 = sand.u32 %s65, 1
        %s286 = smul.addr %s285, 4
        %s287 = scalar_lea.vmem [#allocation7], %s286
        %p288 = pneg %p78
        %p289 = pneg %p75
        %p290 = pneg %p99
        %p291 = pneg %p96
        %p292 = pneg %p120
        %p293 = pneg %p117
        %p294 = pneg %p141
        %p295 = pneg %p138
        %p296 = pneg %p169
        %p297 = pneg %p166
        %s298 = sand.u32 %s156, 1
        %s299 = scalar_lea.sflag [#allocation5], %s298
        %s300 = sand.u32 %s156, 1
        %s301 = smul.addr %s300, 8
        %s302 = scalar_lea.vmem [#allocation11], %s301
        %p304 = scmp.eq.s32.totalorder %s29, 0
        // Predicated region
        $region57: #{tpu_custom_call.1} parent=39 // pred_check
          %p305 = pneg %p304
        $region58: #{tpu_custom_call.1} parent=39 // pred_check_branch
          %307 = sbr.rel (%p305) target = $region60
        $region59: #{tpu_custom_call.1} parent=39 // pred_region
          %v308 = vld [vmem:[%s264] sm:$0xf]
          %v309 = vld [vmem:[#allocation8] sm:$0xf]
          %v310 = vld [vmem:[#allocation8 + $0x4] sm:$0xf]
          %v311 = vld [vmem:[%s3] sm:$0x1]
          %v313 = vperm.slane %v311, 0
          %v317 = vunpack.c.l.b16 %v309
          %v318 = vunpack.c.l.b16 %v310
          %v319 = vpack.c.b16 %v318, %v317
          %vm321 = vcmask 130048
          %v323 = vsel %vm321, %v308, 0
          %325 = vmatpush.bf16.msra.mxu0 0
          %326 = vmatpush.bf16.msra.mxu0 0
          %327 = vmatpush.bf16.msra.mxu0 0
          %328 = vmatpush.bf16.msra.mxu0 0
          %329 = vmatpush.bf16.msra.mxu0 0
          %330 = vmatpush.bf16.msra.mxu0 0
          %331 = vmatpush.bf16.msra.mxu0 0
          %332 = vmatpush.bf16.msra.mxu0 %v319
          %333 = vmatmul.bf16.gmra.mxu0 %v323
          %v334 = vpop.f32.mrf.mxu0
          %v335 = vadd.f32 %v313, %v334
          %v336 = vpop.f32.mrf.mxu0
          %337 = vdwg.mxu0
          %vm338 = vcmask 261120
          %339 = vst.msk [vmem:[#allocation2] sm:$0xff] %vm338, %v335
        $region60: #{tpu_custom_call.1} parent=39 // pred_fallthru
          _
        %v340 = vld [vmem:[#allocation2] sm:$0xff]
        %v341 = vpack.c.bf16 %v340, %v340
        %s342 = smul.u32 %s29, 8
        %s343 = scalar_lea.vmem [#allocation2], %s342
        %v344 = vld [vmem:[%s343] sm:$0xff]
        %v345 = vpack.c.bf16 %v344, %v344
        %v346 = vld [vmem:[#allocation10] sm:$0xf]
        %v347 = vld [vmem:[#allocation10 + $0x4] sm:$0xf]
        %v348 = vld [vmem:[#allocation10 + $0x8] sm:$0xf]
        %v349 = vld [vmem:[#allocation10 + $0xc] sm:$0xf]
        %v354 = vunpack.c.l.b16 %v346
        %v355 = vunpack.c.l.b16 %v347
        %v356 = vunpack.c.l.b16 %v348
        %v357 = vunpack.c.l.b16 %v349
        %v358 = vpack.c.b16 %v355, %v354
        %v359 = vpack.c.b16 %v357, %v356
        %vm362 = vcmask 261120
        %v364 = vsel %vm362, %v345, 0
        %366 = vmatpush.bf16.msra.mxu0 0
        %367 = vmatpush.bf16.msra.mxu0 0
        %368 = vmatpush.bf16.msra.mxu0 0
        %369 = vmatpush.bf16.msra.mxu0 0
        %370 = vmatpush.bf16.msra.mxu0 0
        %371 = vmatpush.bf16.msra.mxu0 0
        %372 = vmatpush.bf16.msra.mxu0 %v359
        %373 = vmatpush.bf16.msra.mxu0 %v358
        %374 = vmatmul.bf16.gmra.mxu0 %v364
        %v375 = vpop.f32.mrf.mxu0
        %v376 = vadd.f32 0.0, %v375
        %v377 = vpop.f32.mrf.mxu0
        %378 = vdwg.mxu0
        %v379 = vpack.c.bf16 %v376, %v376
        %s380 = sld [smem:[#allocation3]]
        %v381 = vstv %s380
        %v383 = vsel %vm362, %v379, 0
        %v386 = vsel %vm362, %v341, 0
        %388 = vmatpush.bf16.xpose.msra.mxu0 0
        %389 = vmatpush.bf16.xpose.msra.mxu0 0
        %390 = vmatpush.bf16.xpose.msra.mxu0 0
        %391 = vmatpush.bf16.xpose.msra.mxu0 0
        %392 = vmatpush.bf16.xpose.msra.mxu0 0
        %393 = vmatpush.bf16.xpose.msra.mxu0 0
        %394 = vmatpush.bf16.xpose.msra.mxu0 0
        %395 = vmatpush.bf16.xpose.msra.mxu0 %v386
        %396 = vmatmul.bf16.gmra.mxu0 %v383
        %v397 = vpop.f32.mrf.mxu0
        %v398 = vadd.f32 %v381, %v397
        %v399 = vpop.f32.mrf.mxu0
        %400 = vdwg.mxu0
        %vm401 = vcmask 64512
        %402 = vst.msk [vmem:[%s302] sm:$0xff] %vm401, %v398
        %s403 = sld [smem:[#allocation3 + $0x1]]
        %v404 = vstv %s403
        %v406 = vunpack.c.l.b16 %v379
        %v407 = vpack.c.b16 %v406, %v406
        %408 = vrot.lane.b32.xlu0 %v407, 96
        %v409 = vpop.permute.xlu0 %408
        %v411 = vsel %vm362, %v409, 0
        %413 = vmatpush.bf16.xpose.msra.mxu0 0
        %414 = vmatpush.bf16.xpose.msra.mxu0 0
        %415 = vmatpush.bf16.xpose.msra.mxu0 0
        %416 = vmatpush.bf16.xpose.msra.mxu0 0
        %417 = vmatpush.bf16.xpose.msra.mxu0 0
        %418 = vmatpush.bf16.xpose.msra.mxu0 0
        %419 = vmatpush.bf16.xpose.msra.mxu0 0
        %420 = vmatpush.bf16.xpose.msra.mxu0 %v386
        %421 = vmatmul.bf16.gmra.mxu0 %v411
        %v422 = vpop.f32.mrf.mxu0
        %v423 = vadd.f32 %v404, %v422
        %v424 = vpop.f32.mrf.mxu0
        %425 = vdwg.mxu0
        %427 = vrot.lane.b32.xlu0 %v423, 8
        %v428 = vpop.permute.xlu0 %427
        %vm430 = vcmask 130112
        %431 = vst.msk [vmem:[%s302] sm:$0xff] %vm430, %v428
        %s432 = sld [smem:[#allocation3 + $0x2]]
        %v433 = vstv %s432
        %434 = vrot.lane.b32.xlu0 %v407, 64
        %v435 = vpop.permute.xlu0 %434
        %v437 = vsel %vm362, %v435, 0
        %439 = vmatpush.bf16.xpose.msra.mxu0 0
        %440 = vmatpush.bf16.xpose.msra.mxu0 0
        %441 = vmatpush.bf16.xpose.msra.mxu0 0
        %442 = vmatpush.bf16.xpose.msra.mxu0 0
        %443 = vmatpush.bf16.xpose.msra.mxu0 0
        %444 = vmatpush.bf16.xpose.msra.mxu0 0
        %445 = vmatpush.bf16.xpose.msra.mxu0 0
        %446 = vmatpush.bf16.xpose.msra.mxu0 %v386
        %447 = vmatmul.bf16.gmra.mxu0 %v437
        %v448 = vpop.f32.mrf.mxu0
        %v449 = vadd.f32 %v433, %v448
        %v450 = vpop.f32.mrf.mxu0
        %451 = vdwg.mxu0
        %453 = vrot.lane.b32.xlu0 %v449, 16
        %v454 = vpop.permute.xlu0 %453
        %vm456 = vcmask 195712
        %457 = vst.msk [vmem:[%s302] sm:$0xff] %vm456, %v454
        %s458 = sld [smem:[#allocation3 + $0x3]]
        %v459 = vstv %s458
        %460 = vrot.lane.b32.xlu0 %v407, 32
        %v461 = vpop.permute.xlu0 %460
        %v463 = vsel %vm362, %v461, 0
        %465 = vmatpush.bf16.xpose.msra.mxu0 0
        %466 = vmatpush.bf16.xpose.msra.mxu0 0
        %467 = vmatpush.bf16.xpose.msra.mxu0 0
        %468 = vmatpush.bf16.xpose.msra.mxu0 0
        %469 = vmatpush.bf16.xpose.msra.mxu0 0
        %470 = vmatpush.bf16.xpose.msra.mxu0 0
        %471 = vmatpush.bf16.xpose.msra.mxu0 0
        %472 = vmatpush.bf16.xpose.msra.mxu0 %v386
        %473 = vmatmul.bf16.gmra.mxu0 %v463
        %v474 = vpop.f32.mrf.mxu0
        %v475 = vadd.f32 %v459, %v474
        %v476 = vpop.f32.mrf.mxu0
        %477 = vdwg.mxu0
        %479 = vrot.lane.b32.xlu0 %v475, 24
        %v480 = vpop.permute.xlu0 %479
        %vm482 = vcmask 261312
        %483 = vst.msk [vmem:[%s302] sm:$0xff] %vm482, %v480
        %s484 = sand.u32 %s156, 1
        %s485 = scalar_lea.sflag [#allocation5], %s484
        %s486 = sand.u32 %s156, 1
        %s487 = smul.addr %s486, 8
        %s488 = scalar_lea.vmem [#allocation11], %s487
        // Predicated region
        $region61: #{tpu_custom_call.1} parent=39 // pred_check
          %p489 = pneg %p166
        $region62: #{tpu_custom_call.1} parent=39 // pred_check_branch
          %491 = sbr.rel (%p489) target = $region64
        $region63: #{tpu_custom_call.1} parent=39 // pred_region
          %493 = vsyncadd %s485, 0
          %s494 = sadd.s32 %s29, %s28
          %s495 = smul.addr %s494, 8
          %s496 = scalar_lea.hbm %s5, %s495
          %s498 = sshll.u32 %s488, 4
          %s499 = int_to_ptr.vmem [resolvable:$true] %s498
          %s500 = sshll.u32 %s496, 4
          %s501 = int_to_ptr.hbm [resolvable:$true] %s500
          %503 = dma.vmem_to_hbm [thread:$0]  %s499, 128, %s501, %s485
        $region64: #{tpu_custom_call.1} parent=39 // pred_fallthru
          _
      $region40: #{tpu_custom_call.1} parent=5 // pred_fallthru
        _
      %p504 = scmp.le.s32.totalorder 2, %s19
      // Predicated region
      $region65: #{tpu_custom_call.1} parent=5 // pred_check
        %p505 = pneg %p504
      $region66: #{tpu_custom_call.1} parent=5 // pred_check_branch
        %507 = sbr.rel (%p505) target = $region68
      $region67: #{tpu_custom_call.1} parent=5 // pred_region
        %s508 = ssub.s32 %s19, 2
        // Predicated region
        $region69: #{tpu_custom_call.1} parent=67 // pred_check
          %p509 = pneg %p172
        $region70: #{tpu_custom_call.1} parent=67 // pred_check_branch
          %511 = sbr.rel (%p509) target = $region72
        $region71: #{tpu_custom_call.1} parent=67 // pred_region
          %s512 = sand.u32 %s157, 1
          %s513 = scalar_lea.sflag [#allocation5], %s512
          %s514 = sand.u32 %s157, 1
          %s515 = smul.addr %s514, 8
          %s516 = scalar_lea.vmem [#allocation11], %s515
          %518 = dma.done %s513, 128
        $region72: #{tpu_custom_call.1} parent=67 // pred_fallthru
          _
      $region68: #{tpu_custom_call.1} parent=5 // pred_fallthru
        _
    $region6: #{tpu_custom_call.1} parent=1 // loop_footer
      %s23 = sadd.s32 1, %s19
    $region7: #{tpu_custom_call.1} parent=1 // loop_footer_branch
      %18 = sbr.rel target = $region3
    $region8: #{tpu_custom_call.1} parent=1 // loop_exit
      _
    %519 = vsyncpa [#allocation4], 1
    %s520 = scalar_lea.sflag [#allocation4], 1
    %521 = vsyncpa %s520, 1
    %522 = vsyncpa [#allocation9], 1
    %523 = vsyncpa [#allocation5], 1
    %s524 = scalar_lea.sflag [#allocation5], 1
    %525 = vsyncpa %s524, 1
    %526 = vsyncpa [#allocation6], 1
    %s527 = scalar_lea.sflag [#allocation6], 1
    %528 = vsyncpa %s527, 1

</llo_original>
